<compile_context>
chip_gen: v7x
topology: tpu7x:2x2x1
jax: 0.10.0
libtpu: 0.0.40
codegen_flags: <defaults>
</compile_context>

<pallas_src>
import functools

import jax
import jax.numpy as jnp
from jax.experimental import pallas as pl
from jax.experimental.pallas import tpu as pltpu


# ---------------------------------------------------------------------------
# Fused Pallas kernel: matmul -> SiLU -> matmul (+ bias)
# ---------------------------------------------------------------------------

def _fused_diffusion_kernel(rhs_ref, w1_ref, w2_ref, b2_ref, o_ref, *, bf16_silu):
    # rhs_ref : (K, HW)        bf16   rows = [x (B*C) | noise (B*C) | mask (B) | ones (1)]
    # w1_ref  : (B*hidden, K)  bf16   block-diag, sa/sb/mask_conv/cond folded in
    # w2_ref  : (B*Cout, B*hidden) bf16  block-diag second 1x1 conv
    # b2_ref  : (B*Cout, 1)    f32
    # o_ref   : (B*Cout, HW)   f32
    h = jnp.dot(w1_ref[...], rhs_ref[...],
                preferred_element_type=jnp.float32)            # (B*hidden, HW) f32
    if bf16_silu:
        hb = h.astype(jnp.bfloat16)
        hb = hb * jax.nn.sigmoid(hb)                           # bf16 SiLU (v6e/v7x)
    else:
        hb = (h * jax.nn.sigmoid(h)).astype(jnp.bfloat16)      # f32 SiLU (v5e-safe)
    out = jnp.dot(w2_ref[...], hb,
                  preferred_element_type=jnp.float32)          # (B*Cout, HW) f32
    o_ref[...] = (out + b2_ref[...]).astype(o_ref.dtype)


def _prefer_bf16_silu() -> bool:
    """bf16 elementwise/EUP is native on v6e/v7x only; default to f32 otherwise."""
    try:
        kind = jax.devices()[0].device_kind.lower()
    except Exception:
        return False
    return ("v6" in kind) or ("v7" in kind)


# ---------------------------------------------------------------------------
# Wrapper (glue: RNG, tiny conditioning math, parameter folding, reshapes)
# ---------------------------------------------------------------------------

def sinusoidal_embedding(t, dim):
    half = dim // 2
    freqs = jnp.exp(-jnp.log(10000.0) * jnp.arange(half, dtype=jnp.float32) / half)
    args = t.astype(jnp.float32)[:, None] * freqs[None, :]
    return jnp.concatenate([jnp.sin(args), jnp.cos(args)], axis=-1)


def latent_diffusion_forward(x, mask, color_palette, key, params):
    """LatentDiffusion.forward (eval, input_type='latent', metadata=None).

    Mirrors:
        noised_x, noise, t = self.noise_scheduler(x)
        mask = self.mask_conv(mask); noised_x = cat([noised_x, mask], dim=1)
        color_palette = self.color_palette_cond(color_palette)
        metadata = color_palette
        predicted_noise = self.unet(noised_x, t, metadata)
        return predicted_noise, noise, t
    """
    # TODO(synk): CategoricalFeaturesEncoder (metadata_cond) and the real UNet
    # architecture are not defined in the source; a time/context-conditioned
    # per-pixel MLP denoiser is used as the UNet stand-in (same as before).
    B, C, H, W = x.shape
    HW = H * W
    alpha_bars = params["alpha_bars"]
    T = alpha_bars.shape[0]

    # --- NoiseScheduler: sample t, noise, per-batch coefficients ------------
    k_t, k_n = jax.random.split(key)
    t = jax.random.randint(k_t, (B,), 0, T)
    noise = jax.random.normal(k_n, x.shape, dtype=x.dtype)
    ab = alpha_bars[t]
    sa = jnp.sqrt(ab).astype(x.dtype)                         # (B,)  sqrt(ab[t])
    sb = jnp.sqrt(1.0 - ab).astype(x.dtype)                   # (B,)  sqrt(1-ab[t])

    # --- fold everything linear into the first matmul (tiny XLA ops) --------
    u = params["unet"]
    w1 = u["w1"]                                   # (C+1, hidden); row C = mask chan
    hidden = w1.shape[1]
    w2 = u["w2"]                                   # (hidden, Cout)
    Cout = w2.shape[1]

    temb = sinusoidal_embedding(t, params["temb_dim"]).astype(x.dtype)       # (B, temb)
    # Linear(3, ctx_dim) commutes with the token-mean used by the stand-in UNet.
    ctx = jnp.mean(color_palette, axis=1) @ params["cp_w"] + params["cp_b"]  # (B, ctx)
    mask_w = params["mask_w"][0]
    mask_b = params["mask_b"][0]

    w1_x = w1[:C].T                                # (hidden, C) latent channels
    w1_m = mask_w * w1[C]                          # (hidden,)   folded mask conv weight
    # Per-batch conditioning bias: b1 + mask_b*w1[C] + temb@wt + ctx@wc
    cond = (u["b1"][None, :]
            + mask_b * w1[C][None, :]
            + temb @ u["wt"]
            + ctx @ u["wc"]).astype(x.dtype)       # (B, hidden)

    eye = jnp.eye(B, dtype=x.dtype)
    # Block-diagonal, sa/sb-scaled first-conv weights (noising folded into K):
    #   h_b = W1x @ (sa[b]*x_b + sb[b]*n_b) = (sa[b]*W1x)@x_b + (sb[b]*W1x)@n_b
    blk_a = jnp.einsum('pq,p,hc->phqc', eye, sa, w1_x).reshape(B * hidden, B * C)
    blk_b = jnp.einsum('pq,p,hc->phqc', eye, sb, w1_x).reshape(B * hidden, B * C)
    blk_m = jnp.einsum('pq,h->phq', eye, w1_m).reshape(B * hidden, B)
    cond_col = cond.reshape(B * hidden, 1)
    w1_full = jnp.concatenate([blk_a, blk_b, blk_m, cond_col],
                              axis=1).astype(jnp.bfloat16)     # (B*hidden, 2BC+B+1)

    w2_full = jnp.einsum('pq,ch->pcqh', eye, w2.T
                         ).reshape(B * Cout, B * hidden).astype(jnp.bfloat16)
    b2_full = jnp.tile(u["b2"][None, :], (B, 1)).reshape(B * Cout, 1).astype(x.dtype)

    # Augmented RHS: pure reshapes of NCHW + a ones row; batch lives on sublanes,
    # HW=256 on the 128-wide lane axis.
    x_r = x.reshape(B * C, HW)
    n_r = noise.reshape(B * C, HW)
    m_r = mask.reshape(B, HW)
    ones_r = jnp.ones((1, HW), x.dtype)
    rhs = jnp.concatenate([x_r, n_r, m_r, ones_r], axis=0).astype(jnp.bfloat16)

    Kdim = 2 * B * C + B + 1
    BH = B * hidden
    BCo = B * Cout

    kernel = functools.partial(_fused_diffusion_kernel,
                               bf16_silu=_prefer_bf16_silu())

    pred_flat = pl.pallas_call(
        kernel,
        out_shape=jax.ShapeDtypeStruct((BCo, HW), x.dtype),
        grid=(1,),                                             # single program
        in_specs=[
            pl.BlockSpec((Kdim, HW), lambda i: (0, 0)),        # rhs
            pl.BlockSpec((BH, Kdim), lambda i: (0, 0)),        # w1_full
            pl.BlockSpec((BCo, BH), lambda i: (0, 0)),         # w2_full
            pl.BlockSpec((BCo, 1), lambda i: (0, 0)),          # b2_full
        ],
        out_specs=pl.BlockSpec((BCo, HW), lambda i: (0, 0)),
        compiler_params=pltpu.CompilerParams(
            dimension_semantics=("arbitrary",)),
    )(rhs, w1_full, w2_full, b2_full)

    # (B*Cout, HW) rows are batch-major, channel-minor -> pure reshape back.
    return pred_flat.reshape(B, Cout, H, W), noise, t


# ---------------------------------------------------------------------------
# Main
# ---------------------------------------------------------------------------

if __name__ == "__main__":
    key = jax.random.PRNGKey(0)
    B, C, H, W = 2, 4, 16, 16          # latent: [B, 4, 16, 16]
    ctx_dim = 32                        # unet.context_dim
    hidden = 128                        # stand-in UNet hidden width (lane-friendly)
    temb_dim = 32
    P = 8                               # palette tokens
    T = 1000                            # noise_scheduler.timesteps

    keys = jax.random.split(key, 12)
    x = jax.random.normal(keys[0], (B, C, H, W), dtype=jnp.float32)
    mask = (jax.random.uniform(keys[1], (B, 1, H, W)) > 0.5).astype(jnp.float32)
    color_palette = jax.random.uniform(keys[2], (B, P, 3), dtype=jnp.float32)

    betas = jnp.linspace(1e-4, 0.02, T, dtype=jnp.float32)
    alpha_bars = jnp.cumprod(1.0 - betas)

    Cin = C + 1                         # latent channels + 1 mask channel (folded)
    params = {
        "alpha_bars": alpha_bars,
        # mask_conv = Conv2d(1, 1, 1): one weight scalar, one bias scalar
        "mask_w": jax.random.normal(keys[3], (1,), dtype=jnp.float32),
        "mask_b": 0.1 * jax.random.normal(keys[4], (1,), dtype=jnp.float32),
        # color_palette_cond = Linear(3, ctx_dim)
        "cp_w": 0.1 * jax.random.normal(keys[5], (3, ctx_dim), dtype=jnp.float32),
        "cp_b": jnp.zeros((ctx_dim,), dtype=jnp.float32),
        "temb_dim": temb_dim,
        "unet": {
            "w1": 0.1 * jax.random.normal(keys[6], (Cin, hidden), dtype=jnp.float32),
            "b1": jnp.zeros((hidden,), dtype=jnp.float32),
            "wt": 0.1 * jax.random.normal(keys[7], (temb_dim, hidden), dtype=jnp.float32),
            "wc": 0.1 * jax.random.normal(keys[8], (ctx_dim, hidden), dtype=jnp.float32),
            "w2": 0.1 * jax.random.normal(keys[9], (hidden, C), dtype=jnp.float32),
            "b2": jnp.zeros((C,), dtype=jnp.float32),
        },
    }

    pred, noise, t = latent_diffusion_forward(x, mask, color_palette, keys[10], params)
    jax.block_until_ready((pred, noise, t))

    assert pred.shape == (B, C, H, W)
    assert noise.shape == (B, C, H, W)
    assert t.shape == (B,)
    assert bool(jnp.all(jnp.isfinite(pred)))
    print("KERNEL_OK")
</pallas_src>

<mosaic_0001>
module attributes {stable_mosaic.version = 11 : i64} {
  func.func @_fused_diffusion_kernel(%arg0: i32, %arg1: memref<19x256xbf16, #tpu.memory_space<vmem>>, %arg2: memref<256x19xbf16, #tpu.memory_space<vmem>>, %arg3: memref<8x256xbf16, #tpu.memory_space<vmem>>, %arg4: memref<8x1xf32, #tpu.memory_space<vmem>>, %arg5: memref<8x256xf32, #tpu.memory_space<vmem>>) attributes {dimension_semantics = [#tpu.dimension_semantics<arbitrary>], iteration_bounds = array<i64: 1>, scalar_prefetch = 0 : i64, scratch_operands = 0 : i64, tpu.core_type = #tpu.core_type<tc>, window_params = [{pipeline_mode = #tpu.pipeline_mode<synchronous>, transform_indices = @transform_0, window_bounds = array<i64: 19, 256>}, {pipeline_mode = #tpu.pipeline_mode<synchronous>, transform_indices = @transform_1, window_bounds = array<i64: 256, 19>}, {pipeline_mode = #tpu.pipeline_mode<synchronous>, transform_indices = @transform_2, window_bounds = array<i64: 8, 256>}, {pipeline_mode = #tpu.pipeline_mode<synchronous>, transform_indices = @transform_3, window_bounds = array<i64: 8, 1>}, {pipeline_mode = #tpu.pipeline_mode<synchronous>, transform_indices = @transform_4, window_bounds = array<i64: 8, 256>}]} {
    %c0 = arith.constant 0 : index
    %c0_0 = arith.constant 0 : index
    %0 = vector.load %arg2[%c0, %c0_0] : memref<256x19xbf16, #tpu.memory_space<vmem>>, vector<256x19xbf16>
    %c0_1 = arith.constant 0 : index
    %c0_2 = arith.constant 0 : index
    %1 = vector.load %arg1[%c0_1, %c0_2] : memref<19x256xbf16, #tpu.memory_space<vmem>>, vector<19x256xbf16>
    %cst = arith.constant dense<0.000000e+00> : vector<256x256xf32>
    %2 = tpu.matmul %0, %1, %cst {dimension_numbers = #tpu.dot_dimension_numbers<[1], [0], [0], [1], [0, 0, 1, 1], [], []>} : vector<256x19xbf16>, vector<19x256xbf16>, vector<256x256xf32> -> vector<256x256xf32>
    %3 = arith.negf %2 : vector<256x256xf32>
    %4 = math.exp %3 : vector<256x256xf32>
    %cst_3 = arith.constant 1.000000e+00 : f32
    %5 = vector.broadcast %cst_3 : f32 to vector<256x256xf32>
    %6 = arith.addf %5, %4 : vector<256x256xf32>
    %7 = arith.divf %5, %6 : vector<256x256xf32>
    %8 = arith.mulf %2, %7 : vector<256x256xf32>
    %9 = arith.truncf %8 : vector<256x256xf32> to vector<256x256xbf16>
    %c0_4 = arith.constant 0 : index
    %c0_5 = arith.constant 0 : index
    %10 = vector.load %arg3[%c0_4, %c0_5] : memref<8x256xbf16, #tpu.memory_space<vmem>>, vector<8x256xbf16>
    %cst_6 = arith.constant dense<0.000000e+00> : vector<8x256xf32>
    %11 = tpu.matmul %10, %9, %cst_6 {dimension_numbers = #tpu.dot_dimension_numbers<[1], [0], [0], [1], [0, 0, 1, 1], [], []>} : vector<8x256xbf16>, vector<256x256xbf16>, vector<8x256xf32> -> vector<8x256xf32>
    %c0_7 = arith.constant 0 : index
    %c0_8 = arith.constant 0 : index
    %12 = vector.load %arg4[%c0_7, %c0_8] : memref<8x1xf32, #tpu.memory_space<vmem>>, vector<8x1xf32>
    %13 = vector.broadcast %12 : vector<8x1xf32> to vector<8x256xf32>
    %14 = arith.addf %11, %13 : vector<8x256xf32>
    %c0_9 = arith.constant 0 : index
    %c0_10 = arith.constant 0 : index
    %15 = vector.load %arg5[%c0_9, %c0_10] : memref<8x256xf32, #tpu.memory_space<vmem>>, vector<8x256xf32>
    tpu.vector_store %arg5[%c0_9, %c0_10], %14 {strides = array<i32>} : memref<8x256xf32, #tpu.memory_space<vmem>>, vector<8x256xf32>,
    return
  }
  func.func @transform_0(%arg0: i32) -> (i32, i32) {
    %c0_i32 = arith.constant 0 : i32
    %c0_i32_0 = arith.constant 0 : i32
    %c0_i32_1 = arith.constant 0 : i32
    return %c0_i32, %c0_i32_0 : i32, i32
  }
  func.func @transform_1(%arg0: i32) -> (i32, i32) {
    %c0_i32 = arith.constant 0 : i32
    %c0_i32_0 = arith.constant 0 : i32
    %c0_i32_1 = arith.constant 0 : i32
    return %c0_i32, %c0_i32_0 : i32, i32
  }
  func.func @transform_2(%arg0: i32) -> (i32, i32) {
    %c0_i32 = arith.constant 0 : i32
    %c0_i32_0 = arith.constant 0 : i32
    %c0_i32_1 = arith.constant 0 : i32
    return %c0_i32, %c0_i32_0 : i32, i32
  }
  func.func @transform_3(%arg0: i32) -> (i32, i32) {
    %c0_i32 = arith.constant 0 : i32
    %c0_i32_0 = arith.constant 0 : i32
    %c0_i32_1 = arith.constant 0 : i32
    return %c0_i32, %c0_i32_0 : i32, i32
  }
  func.func @transform_4(%arg0: i32) -> (i32, i32) {
    %c0_i32 = arith.constant 0 : i32
    %c0_i32_0 = arith.constant 0 : i32
    %c0_i32_1 = arith.constant 0 : i32
    return %c0_i32, %c0_i32_0 : i32, i32
  }
}

</mosaic_0001>

<llo_original>
// kernel: tpu_custom_call.1
$region0: #{tpu_custom_call.1}
  #allocation0 [shape = 'u32[]', space=smem, size = 0x4, offset = 0x4, fixed_abs, tag = 'smem constant byte address 0x4 - core index']
  #allocation1 [shape = 'u32[144,128]{1,0:T(1,128)}', space=vmem, size = 0x12000, scoped, tag = 'internal scratch']
  %s0 = inlined_call_operand.vmem [shape: bf16[19,256], index: 0, kind: input, shape index: {}]
  %s1 = inlined_call_operand.vmem [shape: bf16[256,19], index: 1, kind: input, shape index: {}]
  %s2 = inlined_call_operand.vmem [shape: bf16[8,256], index: 2, kind: input, shape index: {}]
  %s3 = inlined_call_operand.vmem [shape: f32[8,1], index: 3, kind: input, shape index: {}]
  %s4 = inlined_call_operand.hbm [shape: f32[8,256], index: 4, kind: output, shape index: {}]
  %s5 = sld [smem:[#allocation0]]
  $region26: #{tpu_custom_call.1} parent=0
    _
  %s7 = ssub.s32 1, %s5
  %s8 = scalar_select 0, %s7, %s5
  $region1: #{tpu_custom_call.1} parent=0
    #allocation2 [shape = 'u8[8192]{0}', space=vmem, size = 0x2000, scoped, tag = 'output window, operand 0, single buffered']
    #allocation3 [shape = 's32[1]{0}', space=sflag, size = 0x4, scoped, tag = 'scoped memory for tpu_custom_call.1']
    %9 = vsyncpa [#allocation3], 0
    // Predicated region
    $region2: #{tpu_custom_call.1} parent=1 // pred_check
      _
    $region3: #{tpu_custom_call.1} parent=1 // pred_check_branch
      %11 = sbr.rel (0) target = $region5
    $region4: #{tpu_custom_call.1} parent=1 // pred_region
      _
    $region5: #{tpu_custom_call.1} parent=1 // pred_fallthru
      _
    // Predicated region
    $region6: #{tpu_custom_call.1} parent=1 // pred_check
      _
    $region7: #{tpu_custom_call.1} parent=1 // pred_check_branch
      %13 = sbr.rel (0) target = $region9
    $region8: #{tpu_custom_call.1} parent=1 // pred_region
      _
    $region9: #{tpu_custom_call.1} parent=1 // pred_fallthru
      _
    // Predicated region
    $region10: #{tpu_custom_call.1} parent=1 // pred_check
      _
    $region11: #{tpu_custom_call.1} parent=1 // pred_check_branch
      %15 = sbr.rel (0) target = $region13
    $region12: #{tpu_custom_call.1} parent=1 // pred_region
      _
    $region13: #{tpu_custom_call.1} parent=1 // pred_fallthru
      _
    // Predicated region
    $region14: #{tpu_custom_call.1} parent=1 // pred_check
      _
    $region15: #{tpu_custom_call.1} parent=1 // pred_check_branch
      %17 = sbr.rel (0) target = $region17
    $region16: #{tpu_custom_call.1} parent=1 // pred_region
      _
    $region17: #{tpu_custom_call.1} parent=1 // pred_fallthru
      _
    %v19 = vld [vmem:[%s1] sm:$0xf]
    %v20 = vld [vmem:[%s1 + $0x4] sm:$0xf]
    %v21 = vld [vmem:[%s1 + $0x8] sm:$0xf]
    %v22 = vld [vmem:[%s1 + $0xc] sm:$0xf]
    %v23 = vld [vmem:[%s1 + $0x10] sm:$0xf]
    %v24 = vld [vmem:[%s1 + $0x14] sm:$0xf]
    %v25 = vld [vmem:[%s1 + $0x18] sm:$0xf]
    %v26 = vld [vmem:[%s1 + $0x1c] sm:$0xf]
    %v27 = vld [vmem:[%s1 + $0x20] sm:$0xf]
    %v28 = vld [vmem:[%s1 + $0x24] sm:$0xf]
    %v29 = vld [vmem:[%s1 + $0x28] sm:$0xf]
    %v30 = vld [vmem:[%s1 + $0x2c] sm:$0xf]
    %v31 = vld [vmem:[%s1 + $0x30] sm:$0xf]
    %v32 = vld [vmem:[%s1 + $0x34] sm:$0xf]
    %v33 = vld [vmem:[%s1 + $0x38] sm:$0xf]
    %v34 = vld [vmem:[%s1 + $0x3c] sm:$0xf]
    %v35 = vld [vmem:[%s1 + $0x40] sm:$0xf]
    %v36 = vld [vmem:[%s1 + $0x44] sm:$0xf]
    %v37 = vld [vmem:[%s1 + $0x48] sm:$0xf]
    %v38 = vld [vmem:[%s1 + $0x4c] sm:$0xf]
    %v39 = vld [vmem:[%s1 + $0x50] sm:$0xf]
    %v40 = vld [vmem:[%s1 + $0x54] sm:$0xf]
    %v41 = vld [vmem:[%s1 + $0x58] sm:$0xf]
    %v42 = vld [vmem:[%s1 + $0x5c] sm:$0xf]
    %v43 = vld [vmem:[%s1 + $0x60] sm:$0xf]
    %v44 = vld [vmem:[%s1 + $0x64] sm:$0xf]
    %v45 = vld [vmem:[%s1 + $0x68] sm:$0xf]
    %v46 = vld [vmem:[%s1 + $0x6c] sm:$0xf]
    %v47 = vld [vmem:[%s1 + $0x70] sm:$0xf]
    %v48 = vld [vmem:[%s1 + $0x74] sm:$0xf]
    %v49 = vld [vmem:[%s1 + $0x78] sm:$0xf]
    %v50 = vld [vmem:[%s1 + $0x7c] sm:$0xf]
    %v51 = vld [vmem:[%s0] sm:$0xff]
    %v52 = vld [vmem:[%s0 + $0x8] sm:$0xff]
    %v53 = vld [vmem:[%s0 + $0x10] sm:$0x33]
    %v86 = vunpack.c.l.b16 %v19
    %v87 = vunpack.c.l.b16 %v20
    %v88 = vunpack.c.l.b16 %v21
    %v89 = vunpack.c.l.b16 %v22
    %v90 = vunpack.c.l.b16 %v23
    %v91 = vunpack.c.l.b16 %v24
    %v92 = vunpack.c.l.b16 %v25
    %v93 = vunpack.c.l.b16 %v26
    %v94 = vunpack.c.l.b16 %v27
    %v95 = vunpack.c.l.b16 %v28
    %v96 = vunpack.c.l.b16 %v29
    %v97 = vunpack.c.l.b16 %v30
    %v98 = vunpack.c.l.b16 %v31
    %v99 = vunpack.c.l.b16 %v32
    %v100 = vunpack.c.l.b16 %v33
    %v101 = vunpack.c.l.b16 %v34
    %v102 = vunpack.c.l.b16 %v35
    %v103 = vunpack.c.l.b16 %v36
    %v104 = vunpack.c.l.b16 %v37
    %v105 = vunpack.c.l.b16 %v38
    %v106 = vunpack.c.l.b16 %v39
    %v107 = vunpack.c.l.b16 %v40
    %v108 = vunpack.c.l.b16 %v41
    %v109 = vunpack.c.l.b16 %v42
    %v110 = vunpack.c.l.b16 %v43
    %v111 = vunpack.c.l.b16 %v44
    %v112 = vunpack.c.l.b16 %v45
    %v113 = vunpack.c.l.b16 %v46
    %v114 = vunpack.c.l.b16 %v47
    %v115 = vunpack.c.l.b16 %v48
    %v116 = vunpack.c.l.b16 %v49
    %v117 = vunpack.c.l.b16 %v50
    %v118 = vpack.c.b16 %v87, %v86
    %v119 = vpack.c.b16 %v89, %v88
    %v120 = vpack.c.b16 %v91, %v90
    %v121 = vpack.c.b16 %v93, %v92
    %v122 = vpack.c.b16 %v95, %v94
    %v123 = vpack.c.b16 %v97, %v96
    %v124 = vpack.c.b16 %v99, %v98
    %v125 = vpack.c.b16 %v101, %v100
    %v126 = vpack.c.b16 %v103, %v102
    %v127 = vpack.c.b16 %v105, %v104
    %v128 = vpack.c.b16 %v107, %v106
    %v129 = vpack.c.b16 %v109, %v108
    %v130 = vpack.c.b16 %v111, %v110
    %v131 = vpack.c.b16 %v113, %v112
    %v132 = vpack.c.b16 %v115, %v114
    %v133 = vpack.c.b16 %v117, %v116
    %v137 = vunpack.c.l.b16 %v51
    %v138 = vunpack.c.h.b16 %v51
    %v139 = vunpack.c.l.b16 %v52
    %v140 = vunpack.c.h.b16 %v52
    %v141 = vunpack.c.l.b16 %v53
    %v142 = vunpack.c.h.b16 %v53
    %v143 = vpack.c.b16 %v139, %v137
    %v144 = vpack.c.b16 %v140, %v138
    %v145 = vpack.c.b16 %v141, %v141
    %v146 = vpack.c.b16 %v142, %v142
    %vm149 = vcmask 154624
    %v151 = vsel %vm149, %v118, 0
    %v154 = vsel %vm149, %v119, 0
    %v157 = vsel %vm149, %v120, 0
    %v160 = vsel %vm149, %v121, 0
    %v163 = vsel %vm149, %v122, 0
    %v166 = vsel %vm149, %v123, 0
    %v169 = vsel %vm149, %v124, 0
    %v172 = vsel %vm149, %v125, 0
    %v175 = vsel %vm149, %v126, 0
    %v178 = vsel %vm149, %v127, 0
    %v181 = vsel %vm149, %v128, 0
    %v184 = vsel %vm149, %v129, 0
    %v187 = vsel %vm149, %v130, 0
    %v190 = vsel %vm149, %v131, 0
    %v193 = vsel %vm149, %v132, 0
    %v196 = vsel %vm149, %v133, 0
    %vm198 = vcmask 1040384
    %vm199 = vcmask 1041408
    %v200 = vsel %vm198, 4294967295, 65535
    %v201 = vsel %vm199, %v200, 0
    %v203 = vand.u32 %v145, %v201
    %v206 = vand.u32 %v146, %v201
    %208 = vmatprep.subr.bf16.mxu0 %v144
    %209 = vmatpush1.bf16.msra.mxu0 %v143
    %210 = vmatprep.subr.bf16.mxu0 %v206
    %211 = vmatpush1.bf16.msra.mxu0 %v203
    %212 = vmatprep.subr.bf16.mxu0 0
    %213 = vmatpush1.bf16.msra.mxu0 0
    %214 = vmatprep.subr.bf16.mxu0 0
    %215 = vmatpush1.bf16.msra.mxu0 0
    %216 = vmatprep.subr.bf16.mxu0 0
    %217 = vmatpush1.bf16.msra.mxu0 0
    %218 = vmatprep.subr.bf16.mxu0 0
    %219 = vmatpush1.bf16.msra.mxu0 0
    %220 = vmatprep.subr.bf16.mxu0 0
    %221 = vmatpush1.bf16.msra.mxu0 0
    %222 = vmatprep.subr.bf16.mxu0 0
    %223 = vmatpush1.bf16.msra.mxu0 0
    %224 = vmatprep.subr.bf16.mxu0 0
    %225 = vmatpush1.bf16.msra.mxu0 0
    %226 = vmatprep.subr.bf16.mxu0 0
    %227 = vmatpush1.bf16.msra.mxu0 0
    %228 = vmatprep.subr.bf16.mxu0 0
    %229 = vmatpush1.bf16.msra.mxu0 0
    %230 = vmatprep.subr.bf16.mxu0 0
    %231 = vmatpush1.bf16.msra.mxu0 0
    %232 = vmatprep.subr.bf16.mxu0 0
    %233 = vmatpush1.bf16.msra.mxu0 0
    %234 = vmatprep.subr.bf16.mxu0 0
    %235 = vmatpush1.bf16.msra.mxu0 0
    %236 = vmatprep.subr.bf16.mxu0 0
    %237 = vmatpush1.bf16.msra.mxu0 0
    %238 = vmatprep.subr.bf16.mxu0 0
    %239 = vmatpush1.bf16.msra.mxu0 0
    %240 = vmatprep.mubr.bf16.mxu0 0
    %241 = vmatmul.mubr.bf16.gmra.mrb[0].mxu0 %v151
    %v242 = vpop.f32.mrb[0].mxu0
    %v243 = vadd.f32 0.0, %v242
    %v244 = vpop.f32.mrb[0].mxu0
    %v245 = vadd.f32 0.0, %v244
    %v246 = vpop.f32.mrb[0].mxu0
    %v247 = vadd.f32 0.0, %v246
    %v248 = vpop.f32.mrb[0].mxu0
    %v249 = vadd.f32 0.0, %v248
    %250 = vmatprep.mubr.bf16.mxu0 0
    %251 = vmatmul.mubr.bf16.gmra.mrb[0].mxu0 %v154
    %v252 = vpop.f32.mrb[0].mxu0
    %v253 = vadd.f32 0.0, %v252
    %v254 = vpop.f32.mrb[0].mxu0
    %v255 = vadd.f32 0.0, %v254
    %v256 = vpop.f32.mrb[0].mxu0
    %v257 = vadd.f32 0.0, %v256
    %v258 = vpop.f32.mrb[0].mxu0
    %v259 = vadd.f32 0.0, %v258
    %260 = vmatprep.mubr.bf16.mxu0 0
    %261 = vmatmul.mubr.bf16.gmra.mrb[0].mxu0 %v157
    %v262 = vpop.f32.mrb[0].mxu0
    %v263 = vadd.f32 0.0, %v262
    %v264 = vpop.f32.mrb[0].mxu0
    %v265 = vadd.f32 0.0, %v264
    %v266 = vpop.f32.mrb[0].mxu0
    %v267 = vadd.f32 0.0, %v266
    %v268 = vpop.f32.mrb[0].mxu0
    %v269 = vadd.f32 0.0, %v268
    %270 = vmatprep.mubr.bf16.mxu0 0
    %271 = vmatmul.mubr.bf16.gmra.mrb[0].mxu0 %v160
    %v272 = vpop.f32.mrb[0].mxu0
    %v273 = vadd.f32 0.0, %v272
    %v274 = vpop.f32.mrb[0].mxu0
    %v275 = vadd.f32 0.0, %v274
    %v276 = vpop.f32.mrb[0].mxu0
    %v277 = vadd.f32 0.0, %v276
    %v278 = vpop.f32.mrb[0].mxu0
    %v279 = vadd.f32 0.0, %v278
    %280 = vmatprep.mubr.bf16.mxu0 0
    %281 = vmatmul.mubr.bf16.gmra.mrb[0].mxu0 %v163
    %v282 = vpop.f32.mrb[0].mxu0
    %v283 = vadd.f32 0.0, %v282
    %v284 = vpop.f32.mrb[0].mxu0
    %v285 = vadd.f32 0.0, %v284
    %v286 = vpop.f32.mrb[0].mxu0
    %v287 = vadd.f32 0.0, %v286
    %v288 = vpop.f32.mrb[0].mxu0
    %v289 = vadd.f32 0.0, %v288
    %290 = vmatprep.mubr.bf16.mxu0 0
    %291 = vmatmul.mubr.bf16.gmra.mrb[0].mxu0 %v166
    %v292 = vpop.f32.mrb[0].mxu0
    %v293 = vadd.f32 0.0, %v292
    %v294 = vpop.f32.mrb[0].mxu0
    %v295 = vadd.f32 0.0, %v294
    %v296 = vpop.f32.mrb[0].mxu0
    %v297 = vadd.f32 0.0, %v296
    %v298 = vpop.f32.mrb[0].mxu0
    %v299 = vadd.f32 0.0, %v298
    %300 = vmatprep.mubr.bf16.mxu0 0
    %301 = vmatmul.mubr.bf16.gmra.mrb[0].mxu0 %v169
    %v302 = vpop.f32.mrb[0].mxu0
    %v303 = vadd.f32 0.0, %v302
    %v304 = vpop.f32.mrb[0].mxu0
    %v305 = vadd.f32 0.0, %v304
    %v306 = vpop.f32.mrb[0].mxu0
    %v307 = vadd.f32 0.0, %v306
    %v308 = vpop.f32.mrb[0].mxu0
    %v309 = vadd.f32 0.0, %v308
    %310 = vmatprep.mubr.bf16.mxu0 0
    %311 = vmatmul.mubr.bf16.gmra.mrb[0].mxu0 %v172
    %v312 = vpop.f32.mrb[0].mxu0
    %v313 = vadd.f32 0.0, %v312
    %v314 = vpop.f32.mrb[0].mxu0
    %v315 = vadd.f32 0.0, %v314
    %v316 = vpop.f32.mrb[0].mxu0
    %v317 = vadd.f32 0.0, %v316
    %v318 = vpop.f32.mrb[0].mxu0
    %v319 = vadd.f32 0.0, %v318
    %320 = vmatprep.mubr.bf16.mxu0 0
    %321 = vmatmul.mubr.bf16.gmra.mrb[0].mxu0 %v175
    %v322 = vpop.f32.mrb[0].mxu0
    %v323 = vadd.f32 0.0, %v322
    %v324 = vpop.f32.mrb[0].mxu0
    %v325 = vadd.f32 0.0, %v324
    %v326 = vpop.f32.mrb[0].mxu0
    %v327 = vadd.f32 0.0, %v326
    %v328 = vpop.f32.mrb[0].mxu0
    %v329 = vadd.f32 0.0, %v328
    %330 = vmatprep.mubr.bf16.mxu0 0
    %331 = vmatmul.mubr.bf16.gmra.mrb[0].mxu0 %v178
    %v332 = vpop.f32.mrb[0].mxu0
    %v333 = vadd.f32 0.0, %v332
    %v334 = vpop.f32.mrb[0].mxu0
    %v335 = vadd.f32 0.0, %v334
    %v336 = vpop.f32.mrb[0].mxu0
    %v337 = vadd.f32 0.0, %v336
    %v338 = vpop.f32.mrb[0].mxu0
    %v339 = vadd.f32 0.0, %v338
    %340 = vmatprep.mubr.bf16.mxu0 0
    %341 = vmatmul.mubr.bf16.gmra.mrb[0].mxu0 %v181
    %v342 = vpop.f32.mrb[0].mxu0
    %v343 = vadd.f32 0.0, %v342
    %v344 = vpop.f32.mrb[0].mxu0
    %v345 = vadd.f32 0.0, %v344
    %v346 = vpop.f32.mrb[0].mxu0
    %v347 = vadd.f32 0.0, %v346
    %v348 = vpop.f32.mrb[0].mxu0
    %v349 = vadd.f32 0.0, %v348
    %350 = vmatprep.mubr.bf16.mxu0 0
    %351 = vmatmul.mubr.bf16.gmra.mrb[0].mxu0 %v184
    %v352 = vpop.f32.mrb[0].mxu0
    %v353 = vadd.f32 0.0, %v352
    %v354 = vpop.f32.mrb[0].mxu0
    %v355 = vadd.f32 0.0, %v354
    %v356 = vpop.f32.mrb[0].mxu0
    %v357 = vadd.f32 0.0, %v356
    %v358 = vpop.f32.mrb[0].mxu0
    %v359 = vadd.f32 0.0, %v358
    %360 = vmatprep.mubr.bf16.mxu0 0
    %361 = vmatmul.mubr.bf16.gmra.mrb[0].mxu0 %v187
    %v362 = vpop.f32.mrb[0].mxu0
    %v363 = vadd.f32 0.0, %v362
    %v364 = vpop.f32.mrb[0].mxu0
    %v365 = vadd.f32 0.0, %v364
    %v366 = vpop.f32.mrb[0].mxu0
    %v367 = vadd.f32 0.0, %v366
    %v368 = vpop.f32.mrb[0].mxu0
    %v369 = vadd.f32 0.0, %v368
    %370 = vmatprep.mubr.bf16.mxu0 0
    %371 = vmatmul.mubr.bf16.gmra.mrb[0].mxu0 %v190
    %v372 = vpop.f32.mrb[0].mxu0
    %v373 = vadd.f32 0.0, %v372
    %v374 = vpop.f32.mrb[0].mxu0
    %v375 = vadd.f32 0.0, %v374
    %v376 = vpop.f32.mrb[0].mxu0
    %v377 = vadd.f32 0.0, %v376
    %v378 = vpop.f32.mrb[0].mxu0
    %v379 = vadd.f32 0.0, %v378
    %380 = vmatprep.mubr.bf16.mxu0 0
    %381 = vmatmul.mubr.bf16.gmra.mrb[0].mxu0 %v193
    %v382 = vpop.f32.mrb[0].mxu0
    %v383 = vadd.f32 0.0, %v382
    %v384 = vpop.f32.mrb[0].mxu0
    %v385 = vadd.f32 0.0, %v384
    %v386 = vpop.f32.mrb[0].mxu0
    %v387 = vadd.f32 0.0, %v386
    %v388 = vpop.f32.mrb[0].mxu0
    %v389 = vadd.f32 0.0, %v388
    %390 = vmatprep.mubr.bf16.mxu0 0
    %391 = vmatmul.mubr.bf16.gmra.mrb[0].mxu0 %v196
    %v392 = vpop.f32.mrb[0].mxu0
    %v393 = vadd.f32 0.0, %v392
    %v394 = vpop.f32.mrb[0].mxu0
    %v395 = vadd.f32 0.0, %v394
    %v396 = vpop.f32.mrb[0].mxu0
    %v397 = vadd.f32 0.0, %v396
    %v398 = vpop.f32.mrb[0].mxu0
    %v399 = vadd.f32 0.0, %v398
    %400 = vdwg.mxu0
    %v401 = vxor.u32 %v243, 2147483648
    %v402 = vxor.u32 %v245, 2147483648
    %v403 = vxor.u32 %v247, 2147483648
    %v404 = vxor.u32 %v249, 2147483648
    %v405 = vxor.u32 %v253, 2147483648
    %v406 = vxor.u32 %v255, 2147483648
    %v407 = vxor.u32 %v257, 2147483648
    %v408 = vxor.u32 %v259, 2147483648
    %v409 = vxor.u32 %v263, 2147483648
    %v410 = vxor.u32 %v265, 2147483648
    %v411 = vxor.u32 %v267, 2147483648
    %v412 = vxor.u32 %v269, 2147483648
    %v413 = vxor.u32 %v273, 2147483648
    %v414 = vxor.u32 %v275, 2147483648
    %v415 = vxor.u32 %v277, 2147483648
    %v416 = vxor.u32 %v279, 2147483648
    %v417 = vxor.u32 %v283, 2147483648
    %v418 = vxor.u32 %v285, 2147483648
    %v419 = vxor.u32 %v287, 2147483648
    %v420 = vxor.u32 %v289, 2147483648
    %v421 = vxor.u32 %v293, 2147483648
    %v422 = vxor.u32 %v295, 2147483648
    %v423 = vxor.u32 %v297, 2147483648
    %v424 = vxor.u32 %v299, 2147483648
    %v425 = vxor.u32 %v303, 2147483648
    %v426 = vxor.u32 %v305, 2147483648
    %v427 = vxor.u32 %v307, 2147483648
    %v428 = vxor.u32 %v309, 2147483648
    %v429 = vxor.u32 %v313, 2147483648
    %v430 = vxor.u32 %v315, 2147483648
    %v431 = vxor.u32 %v317, 2147483648
    %v432 = vxor.u32 %v319, 2147483648
    %v433 = vxor.u32 %v323, 2147483648
    %v434 = vxor.u32 %v325, 2147483648
    %v435 = vxor.u32 %v327, 2147483648
    %v436 = vxor.u32 %v329, 2147483648
    %v437 = vxor.u32 %v333, 2147483648
    %v438 = vxor.u32 %v335, 2147483648
    %v439 = vxor.u32 %v337, 2147483648
    %v440 = vxor.u32 %v339, 2147483648
    %v441 = vxor.u32 %v343, 2147483648
    %v442 = vxor.u32 %v345, 2147483648
    %v443 = vxor.u32 %v347, 2147483648
    %v444 = vxor.u32 %v349, 2147483648
    %v445 = vxor.u32 %v353, 2147483648
    %v446 = vxor.u32 %v355, 2147483648
    %v447 = vxor.u32 %v357, 2147483648
    %v448 = vxor.u32 %v359, 2147483648
    %v449 = vxor.u32 %v363, 2147483648
    %v450 = vxor.u32 %v365, 2147483648
    %v451 = vxor.u32 %v367, 2147483648
    %v452 = vxor.u32 %v369, 2147483648
    %v453 = vxor.u32 %v373, 2147483648
    %v454 = vxor.u32 %v375, 2147483648
    %v455 = vxor.u32 %v377, 2147483648
    %v456 = vxor.u32 %v379, 2147483648
    %v457 = vxor.u32 %v383, 2147483648
    %v458 = vxor.u32 %v385, 2147483648
    %v459 = vxor.u32 %v387, 2147483648
    %v460 = vxor.u32 %v389, 2147483648
    %v461 = vxor.u32 %v393, 2147483648
    %v462 = vxor.u32 %v395, 2147483648
    %v463 = vxor.u32 %v397, 2147483648
    %v464 = vxor.u32 %v399, 2147483648
    %v465 = vmul.f32 %v401, 1.442695
    %v466 = vpow.pop %v465
    %v467 = vmul.f32 %v402, 1.442695
    %v468 = vpow.pop %v467
    %v469 = vmul.f32 %v403, 1.442695
    %v470 = vpow.pop %v469
    %v471 = vmul.f32 %v404, 1.442695
    %v472 = vpow.pop %v471
    %v473 = vmul.f32 %v405, 1.442695
    %v474 = vpow.pop %v473
    %v475 = vmul.f32 %v406, 1.442695
    %v476 = vpow.pop %v475
    %v477 = vmul.f32 %v407, 1.442695
    %v478 = vpow.pop %v477
    %v479 = vmul.f32 %v408, 1.442695
    %v480 = vpow.pop %v479
    %v481 = vmul.f32 %v409, 1.442695
    %v482 = vpow.pop %v481
    %v483 = vmul.f32 %v410, 1.442695
    %v484 = vpow.pop %v483
    %v485 = vmul.f32 %v411, 1.442695
    %v486 = vpow.pop %v485
    %v487 = vmul.f32 %v412, 1.442695
    %v488 = vpow.pop %v487
    %v489 = vmul.f32 %v413, 1.442695
    %v490 = vpow.pop %v489
    %v491 = vmul.f32 %v414, 1.442695
    %v492 = vpow.pop %v491
    %v493 = vmul.f32 %v415, 1.442695
    %v494 = vpow.pop %v493
    %v495 = vmul.f32 %v416, 1.442695
    %v496 = vpow.pop %v495
    %v497 = vmul.f32 %v417, 1.442695
    %v498 = vpow.pop %v497
    %v499 = vmul.f32 %v418, 1.442695
    %v500 = vpow.pop %v499
    %v501 = vmul.f32 %v419, 1.442695
    %v502 = vpow.pop %v501
    %v503 = vmul.f32 %v420, 1.442695
    %v504 = vpow.pop %v503
    %v505 = vmul.f32 %v421, 1.442695
    %v506 = vpow.pop %v505
    %v507 = vmul.f32 %v422, 1.442695
    %v508 = vpow.pop %v507
    %v509 = vmul.f32 %v423, 1.442695
    %v510 = vpow.pop %v509
    %v511 = vmul.f32 %v424, 1.442695
    %v512 = vpow.pop %v511
    %v513 = vmul.f32 %v425, 1.442695
    %v514 = vpow.pop %v513
    %v515 = vmul.f32 %v426, 1.442695
    %v516 = vpow.pop %v515
    %v517 = vmul.f32 %v427, 1.442695
    %v518 = vpow.pop %v517
    %v519 = vmul.f32 %v428, 1.442695
    %v520 = vpow.pop %v519
    %v521 = vmul.f32 %v429, 1.442695
    %v522 = vpow.pop %v521
    %v523 = vmul.f32 %v430, 1.442695
    %v524 = vpow.pop %v523
    %v525 = vmul.f32 %v431, 1.442695
    %v526 = vpow.pop %v525
    %v527 = vmul.f32 %v432, 1.442695
    %v528 = vpow.pop %v527
    %v529 = vmul.f32 %v433, 1.442695
    %v530 = vpow.pop %v529
    %v531 = vmul.f32 %v434, 1.442695
    %v532 = vpow.pop %v531
    %v533 = vmul.f32 %v435, 1.442695
    %v534 = vpow.pop %v533
    %v535 = vmul.f32 %v436, 1.442695
    %v536 = vpow.pop %v535
    %v537 = vmul.f32 %v437, 1.442695
    %v538 = vpow.pop %v537
    %v539 = vmul.f32 %v438, 1.442695
    %v540 = vpow.pop %v539
    %v541 = vmul.f32 %v439, 1.442695
    %v542 = vpow.pop %v541
    %v543 = vmul.f32 %v440, 1.442695
    %v544 = vpow.pop %v543
    %v545 = vmul.f32 %v441, 1.442695
    %v546 = vpow.pop %v545
    %v547 = vmul.f32 %v442, 1.442695
    %v548 = vpow.pop %v547
    %v549 = vmul.f32 %v443, 1.442695
    %v550 = vpow.pop %v549
    %v551 = vmul.f32 %v444, 1.442695
    %v552 = vpow.pop %v551
    %v553 = vmul.f32 %v445, 1.442695
    %v554 = vpow.pop %v553
    %v555 = vmul.f32 %v446, 1.442695
    %v556 = vpow.pop %v555
    %v557 = vmul.f32 %v447, 1.442695
    %v558 = vpow.pop %v557
    %v559 = vmul.f32 %v448, 1.442695
    %v560 = vpow.pop %v559
    %v561 = vmul.f32 %v449, 1.442695
    %v562 = vpow.pop %v561
    %v563 = vmul.f32 %v450, 1.442695
    %v564 = vpow.pop %v563
    %v565 = vmul.f32 %v451, 1.442695
    %v566 = vpow.pop %v565
    %v567 = vmul.f32 %v452, 1.442695
    %v568 = vpow.pop %v567
    %v569 = vmul.f32 %v453, 1.442695
    %v570 = vpow.pop %v569
    %v571 = vmul.f32 %v454, 1.442695
    %v572 = vpow.pop %v571
    %v573 = vmul.f32 %v455, 1.442695
    %v574 = vpow.pop %v573
    %v575 = vmul.f32 %v456, 1.442695
    %v576 = vpow.pop %v575
    %v577 = vmul.f32 %v457, 1.442695
    %v578 = vpow.pop %v577
    %v579 = vmul.f32 %v458, 1.442695
    %v580 = vpow.pop %v579
    %v581 = vmul.f32 %v459, 1.442695
    %v582 = vpow.pop %v581
    %v583 = vmul.f32 %v460, 1.442695
    %v584 = vpow.pop %v583
    %v585 = vmul.f32 %v461, 1.442695
    %v586 = vpow.pop %v585
    %v587 = vmul.f32 %v462, 1.442695
    %v588 = vpow.pop %v587
    %v589 = vmul.f32 %v463, 1.442695
    %v590 = vpow.pop %v589
    %v591 = vmul.f32 %v464, 1.442695
    %v592 = vpow.pop %v591
    %v593 = vadd.f32 %v466, 1.0
    %v594 = vadd.f32 %v468, 1.0
    %v595 = vadd.f32 %v470, 1.0
    %v596 = vadd.f32 %v472, 1.0
    %v597 = vadd.f32 %v474, 1.0
    %v598 = vadd.f32 %v476, 1.0
    %v599 = vadd.f32 %v478, 1.0
    %v600 = vadd.f32 %v480, 1.0
    %v601 = vadd.f32 %v482, 1.0
    %v602 = vadd.f32 %v484, 1.0
    %v603 = vadd.f32 %v486, 1.0
    %v604 = vadd.f32 %v488, 1.0
    %v605 = vadd.f32 %v490, 1.0
    %v606 = vadd.f32 %v492, 1.0
    %v607 = vadd.f32 %v494, 1.0
    %v608 = vadd.f32 %v496, 1.0
    %v609 = vadd.f32 %v498, 1.0
    %v610 = vadd.f32 %v500, 1.0
    %v611 = vadd.f32 %v502, 1.0
    %v612 = vadd.f32 %v504, 1.0
    %v613 = vadd.f32 %v506, 1.0
    %v614 = vadd.f32 %v508, 1.0
    %v615 = vadd.f32 %v510, 1.0
    %v616 = vadd.f32 %v512, 1.0
    %v617 = vadd.f32 %v514, 1.0
    %v618 = vadd.f32 %v516, 1.0
    %v619 = vadd.f32 %v518, 1.0
    %v620 = vadd.f32 %v520, 1.0
    %v621 = vadd.f32 %v522, 1.0
    %v622 = vadd.f32 %v524, 1.0
    %v623 = vadd.f32 %v526, 1.0
    %v624 = vadd.f32 %v528, 1.0
    %v625 = vadd.f32 %v530, 1.0
    %v626 = vadd.f32 %v532, 1.0
    %v627 = vadd.f32 %v534, 1.0
    %v628 = vadd.f32 %v536, 1.0
    %v629 = vadd.f32 %v538, 1.0
    %v630 = vadd.f32 %v540, 1.0
    %v631 = vadd.f32 %v542, 1.0
    %v632 = vadd.f32 %v544, 1.0
    %v633 = vadd.f32 %v546, 1.0
    %v634 = vadd.f32 %v548, 1.0
    %v635 = vadd.f32 %v550, 1.0
    %v636 = vadd.f32 %v552, 1.0
    %v637 = vadd.f32 %v554, 1.0
    %v638 = vadd.f32 %v556, 1.0
    %v639 = vadd.f32 %v558, 1.0
    %v640 = vadd.f32 %v560, 1.0
    %v641 = vadd.f32 %v562, 1.0
    %v642 = vadd.f32 %v564, 1.0
    %v643 = vadd.f32 %v566, 1.0
    %v644 = vadd.f32 %v568, 1.0
    %v645 = vadd.f32 %v570, 1.0
    %v646 = vadd.f32 %v572, 1.0
    %v647 = vadd.f32 %v574, 1.0
    %v648 = vadd.f32 %v576, 1.0
    %v649 = vadd.f32 %v578, 1.0
    %v650 = vadd.f32 %v580, 1.0
    %v651 = vadd.f32 %v582, 1.0
    %v652 = vadd.f32 %v584, 1.0
    %v653 = vadd.f32 %v586, 1.0
    %v654 = vadd.f32 %v588, 1.0
    %v655 = vadd.f32 %v590, 1.0
    %v656 = vadd.f32 %v592, 1.0
    %v657 = vrcp.pop %v593
    %v658 = vmul.f32 1.0, %v657
    %v659 = vrcp.pop %v594
    %v660 = vmul.f32 1.0, %v659
    %v661 = vrcp.pop %v595
    %v662 = vmul.f32 1.0, %v661
    %v663 = vrcp.pop %v596
    %v664 = vmul.f32 1.0, %v663
    %v665 = vrcp.pop %v597
    %v666 = vmul.f32 1.0, %v665
    %v667 = vrcp.pop %v598
    %v668 = vmul.f32 1.0, %v667
    %v669 = vrcp.pop %v599
    %v670 = vmul.f32 1.0, %v669
    %v671 = vrcp.pop %v600
    %v672 = vmul.f32 1.0, %v671
    %v673 = vrcp.pop %v601
    %v674 = vmul.f32 1.0, %v673
    %v675 = vrcp.pop %v602
    %v676 = vmul.f32 1.0, %v675
    %v677 = vrcp.pop %v603
    %v678 = vmul.f32 1.0, %v677
    %v679 = vrcp.pop %v604
    %v680 = vmul.f32 1.0, %v679
    %v681 = vrcp.pop %v605
    %v682 = vmul.f32 1.0, %v681
    %v683 = vrcp.pop %v606
    %v684 = vmul.f32 1.0, %v683
    %v685 = vrcp.pop %v607
    %v686 = vmul.f32 1.0, %v685
    %v687 = vrcp.pop %v608
    %v688 = vmul.f32 1.0, %v687
    %v689 = vrcp.pop %v609
    %v690 = vmul.f32 1.0, %v689
    %v691 = vrcp.pop %v610
    %v692 = vmul.f32 1.0, %v691
    %v693 = vrcp.pop %v611
    %v694 = vmul.f32 1.0, %v693
    %v695 = vrcp.pop %v612
    %v696 = vmul.f32 1.0, %v695
    %v697 = vrcp.pop %v613
    %v698 = vmul.f32 1.0, %v697
    %v699 = vrcp.pop %v614
    %v700 = vmul.f32 1.0, %v699
    %v701 = vrcp.pop %v615
    %v702 = vmul.f32 1.0, %v701
    %v703 = vrcp.pop %v616
    %v704 = vmul.f32 1.0, %v703
    %v705 = vrcp.pop %v617
    %v706 = vmul.f32 1.0, %v705
    %v707 = vrcp.pop %v618
    %v708 = vmul.f32 1.0, %v707
    %v709 = vrcp.pop %v619
    %v710 = vmul.f32 1.0, %v709
    %v711 = vrcp.pop %v620
    %v712 = vmul.f32 1.0, %v711
    %v713 = vrcp.pop %v621
    %v714 = vmul.f32 1.0, %v713
    %v715 = vrcp.pop %v622
    %v716 = vmul.f32 1.0, %v715
    %v717 = vrcp.pop %v623
    %v718 = vmul.f32 1.0, %v717
    %v719 = vrcp.pop %v624
    %v720 = vmul.f32 1.0, %v719
    %v721 = vrcp.pop %v625
    %v722 = vmul.f32 1.0, %v721
    %v723 = vrcp.pop %v626
    %v724 = vmul.f32 1.0, %v723
    %v725 = vrcp.pop %v627
    %v726 = vmul.f32 1.0, %v725
    %v727 = vrcp.pop %v628
    %v728 = vmul.f32 1.0, %v727
    %v729 = vrcp.pop %v629
    %v730 = vmul.f32 1.0, %v729
    %v731 = vrcp.pop %v630
    %v732 = vmul.f32 1.0, %v731
    %v733 = vrcp.pop %v631
    %v734 = vmul.f32 1.0, %v733
    %v735 = vrcp.pop %v632
    %v736 = vmul.f32 1.0, %v735
    %v737 = vrcp.pop %v633
    %v738 = vmul.f32 1.0, %v737
    %v739 = vrcp.pop %v634
    %v740 = vmul.f32 1.0, %v739
    %v741 = vrcp.pop %v635
    %v742 = vmul.f32 1.0, %v741
    %v743 = vrcp.pop %v636
    %v744 = vmul.f32 1.0, %v743
    %v745 = vrcp.pop %v637
    %v746 = vmul.f32 1.0, %v745
    %v747 = vrcp.pop %v638
    %v748 = vmul.f32 1.0, %v747
    %v749 = vrcp.pop %v639
    %v750 = vmul.f32 1.0, %v749
    %v751 = vrcp.pop %v640
    %v752 = vmul.f32 1.0, %v751
    %v753 = vrcp.pop %v641
    %v754 = vmul.f32 1.0, %v753
    %v755 = vrcp.pop %v642
    %v756 = vmul.f32 1.0, %v755
    %v757 = vrcp.pop %v643
    %v758 = vmul.f32 1.0, %v757
    %v759 = vrcp.pop %v644
    %v760 = vmul.f32 1.0, %v759
    %v761 = vrcp.pop %v645
    %v762 = vmul.f32 1.0, %v761
    %v763 = vrcp.pop %v646
    %v764 = vmul.f32 1.0, %v763
    %v765 = vrcp.pop %v647
    %v766 = vmul.f32 1.0, %v765
    %v767 = vrcp.pop %v648
    %v768 = vmul.f32 1.0, %v767
    %v769 = vrcp.pop %v649
    %v770 = vmul.f32 1.0, %v769
    %v771 = vrcp.pop %v650
    %v772 = vmul.f32 1.0, %v771
    %v773 = vrcp.pop %v651
    %v774 = vmul.f32 1.0, %v773
    %v775 = vrcp.pop %v652
    %v776 = vmul.f32 1.0, %v775
    %v777 = vrcp.pop %v653
    %v778 = vmul.f32 1.0, %v777
    %v779 = vrcp.pop %v654
    %v780 = vmul.f32 1.0, %v779
    %v781 = vrcp.pop %v655
    %v782 = vmul.f32 1.0, %v781
    %v783 = vrcp.pop %v656
    %v784 = vmul.f32 1.0, %v783
    %v785 = vmul.f32 %v243, %v658
    %v786 = vmul.f32 %v245, %v660
    %v787 = vmul.f32 %v247, %v662
    %v788 = vmul.f32 %v249, %v664
    %v789 = vmul.f32 %v253, %v666
    %v790 = vmul.f32 %v255, %v668
    %v791 = vmul.f32 %v257, %v670
    %v792 = vmul.f32 %v259, %v672
    %v793 = vmul.f32 %v263, %v674
    %v794 = vmul.f32 %v265, %v676
    %v795 = vmul.f32 %v267, %v678
    %v796 = vmul.f32 %v269, %v680
    %v797 = vmul.f32 %v273, %v682
    %v798 = vmul.f32 %v275, %v684
    %v799 = vmul.f32 %v277, %v686
    %v800 = vmul.f32 %v279, %v688
    %v801 = vmul.f32 %v283, %v690
    %v802 = vmul.f32 %v285, %v692
    %v803 = vmul.f32 %v287, %v694
    %v804 = vmul.f32 %v289, %v696
    %v805 = vmul.f32 %v293, %v698
    %v806 = vmul.f32 %v295, %v700
    %v807 = vmul.f32 %v297, %v702
    %v808 = vmul.f32 %v299, %v704
    %v809 = vmul.f32 %v303, %v706
    %v810 = vmul.f32 %v305, %v708
    %v811 = vmul.f32 %v307, %v710
    %v812 = vmul.f32 %v309, %v712
    %v813 = vmul.f32 %v313, %v714
    %v814 = vmul.f32 %v315, %v716
    %v815 = vmul.f32 %v317, %v718
    %v816 = vmul.f32 %v319, %v720
    %v817 = vmul.f32 %v323, %v722
    %v818 = vmul.f32 %v325, %v724
    %v819 = vmul.f32 %v327, %v726
    %v820 = vmul.f32 %v329, %v728
    %v821 = vmul.f32 %v333, %v730
    %v822 = vmul.f32 %v335, %v732
    %v823 = vmul.f32 %v337, %v734
    %v824 = vmul.f32 %v339, %v736
    %v825 = vmul.f32 %v343, %v738
    %v826 = vmul.f32 %v345, %v740
    %v827 = vmul.f32 %v347, %v742
    %v828 = vmul.f32 %v349, %v744
    %v829 = vmul.f32 %v353, %v746
    %v830 = vmul.f32 %v355, %v748
    %v831 = vmul.f32 %v357, %v750
    %v832 = vmul.f32 %v359, %v752
    %v833 = vmul.f32 %v363, %v754
    %v834 = vmul.f32 %v365, %v756
    %v835 = vmul.f32 %v367, %v758
    %v836 = vmul.f32 %v369, %v760
    %v837 = vmul.f32 %v373, %v762
    %v838 = vmul.f32 %v375, %v764
    %v839 = vmul.f32 %v377, %v766
    %v840 = vmul.f32 %v379, %v768
    %v841 = vmul.f32 %v383, %v770
    %v842 = vmul.f32 %v385, %v772
    %v843 = vmul.f32 %v387, %v774
    %v844 = vmul.f32 %v389, %v776
    %v845 = vmul.f32 %v393, %v778
    %v846 = vmul.f32 %v395, %v780
    %v847 = vmul.f32 %v397, %v782
    %v848 = vmul.f32 %v399, %v784
    %v849 = vpack.c.bf16 %v787, %v785
    %v850 = vpack.c.bf16 %v788, %v786
    %v851 = vpack.c.bf16 %v791, %v789
    %v852 = vpack.c.bf16 %v792, %v790
    %v853 = vpack.c.bf16 %v795, %v793
    %v854 = vpack.c.bf16 %v796, %v794
    %v855 = vpack.c.bf16 %v799, %v797
    %v856 = vpack.c.bf16 %v800, %v798
    %v857 = vpack.c.bf16 %v803, %v801
    %v858 = vpack.c.bf16 %v804, %v802
    %v859 = vpack.c.bf16 %v807, %v805
    %v860 = vpack.c.bf16 %v808, %v806
    %v861 = vpack.c.bf16 %v811, %v809
    %v862 = vpack.c.bf16 %v812, %v810
    %v863 = vpack.c.bf16 %v815, %v813
    %v864 = vpack.c.bf16 %v816, %v814
    %v865 = vpack.c.bf16 %v819, %v817
    %v866 = vpack.c.bf16 %v820, %v818
    %v867 = vpack.c.bf16 %v823, %v821
    %v868 = vpack.c.bf16 %v824, %v822
    %v869 = vpack.c.bf16 %v827, %v825
    %v870 = vpack.c.bf16 %v828, %v826
    %v871 = vpack.c.bf16 %v831, %v829
    %v872 = vpack.c.bf16 %v832, %v830
    %v873 = vpack.c.bf16 %v835, %v833
    %v874 = vpack.c.bf16 %v836, %v834
    %v875 = vpack.c.bf16 %v839, %v837
    %v876 = vpack.c.bf16 %v840, %v838
    %v877 = vpack.c.bf16 %v843, %v841
    %v878 = vpack.c.bf16 %v844, %v842
    %v879 = vpack.c.bf16 %v847, %v845
    %v880 = vpack.c.bf16 %v848, %v846
    %v881 = vld [vmem:[%s2] sm:$0xff]
    %v882 = vld [vmem:[%s3] sm:$0xff]
    %884 = vset.pattern.permute.xlu0 0
    %885 = vperm.xlu0 %884, %v882
    %v886 = vpop.permute.xlu0 %885
    %v889 = vunpack.c.l.b16 %v881
    %v890 = vunpack.c.h.b16 %v881
    %v891 = vpack.c.b16 %v889, %v889
    %v892 = vpack.c.b16 %v890, %v890
    %895 = vmatprep.subr.bf16.mxu0 %v850
    %896 = vmatpush1.bf16.msra.mxu0 %v849
    %897 = vmatprep.subr.bf16.mxu0 %v852
    %898 = vmatpush1.bf16.msra.mxu0 %v851
    %899 = vmatprep.subr.bf16.mxu0 %v854
    %900 = vmatpush1.bf16.msra.mxu0 %v853
    %901 = vmatprep.subr.bf16.mxu0 %v856
    %902 = vmatpush1.bf16.msra.mxu0 %v855
    %903 = vmatprep.subr.bf16.mxu0 %v858
    %904 = vmatpush1.bf16.msra.mxu0 %v857
    %905 = vmatprep.subr.bf16.mxu0 %v860
    %906 = vmatpush1.bf16.msra.mxu0 %v859
    %907 = vmatprep.subr.bf16.mxu0 %v862
    %908 = vmatpush1.bf16.msra.mxu0 %v861
    %909 = vmatprep.subr.bf16.mxu0 %v864
    %910 = vmatpush1.bf16.msra.mxu0 %v863
    %911 = vmatprep.subr.bf16.mxu0 %v866
    %912 = vmatpush1.bf16.msra.mxu0 %v865
    %913 = vmatprep.subr.bf16.mxu0 %v868
    %914 = vmatpush1.bf16.msra.mxu0 %v867
    %915 = vmatprep.subr.bf16.mxu0 %v870
    %916 = vmatpush1.bf16.msra.mxu0 %v869
    %917 = vmatprep.subr.bf16.mxu0 %v872
    %918 = vmatpush1.bf16.msra.mxu0 %v871
    %919 = vmatprep.subr.bf16.mxu0 %v874
    %920 = vmatpush1.bf16.msra.mxu0 %v873
    %921 = vmatprep.subr.bf16.mxu0 %v876
    %922 = vmatpush1.bf16.msra.mxu0 %v875
    %923 = vmatprep.subr.bf16.mxu0 %v878
    %924 = vmatpush1.bf16.msra.mxu0 %v877
    %925 = vmatprep.subr.bf16.mxu0 %v880
    %926 = vmatpush1.bf16.msra.mxu0 %v879
    %927 = vmatprep.mubr.bf16.mxu0 %v892
    %928 = vmatmul.mubr.bf16.gmra.mrb[0].mxu0 %v891
    %v929 = vpop.f32.mrb[0].mxu0
    %v930 = vadd.f32 %v886, %v929
    %v931 = vpop.f32.mrb[0].mxu0
    %v932 = vadd.f32 %v886, %v931
    %v933 = vpop.f32.mrb[0].mxu0
    %v934 = vpop.f32.mrb[0].mxu0
    %935 = vdwg.mxu0
    %936 = vst [vmem:[#allocation2] sm:$0xff] %v930
    %937 = vst [vmem:[#allocation2 + $0x8] sm:$0xff] %v932
    // Predicated region
    $region18: #{tpu_custom_call.1} parent=1 // pred_check
      _
    $region19: #{tpu_custom_call.1} parent=1 // pred_check_branch
      %939 = sbr.rel (0) target = $region21
    $region20: #{tpu_custom_call.1} parent=1 // pred_region
      %s941 = ssub.s32 256, 256
      %942 = vsyncadd [#allocation3], %s941
      %s944 = sshll.u32 [#allocation2], 4
      %s945 = int_to_ptr.vmem [resolvable:$true] %s944
      %947 = dma.vmem_to_hbm [thread:$0]  %s945, 256, %s4, [#allocation3]
    $region21: #{tpu_custom_call.1} parent=1 // pred_fallthru
      _
    // Predicated region
    $region22: #{tpu_custom_call.1} parent=1 // pred_check
      _
    $region23: #{tpu_custom_call.1} parent=1 // pred_check_branch
      %949 = sbr.rel (0) target = $region25
    $region24: #{tpu_custom_call.1} parent=1 // pred_region
      %950 = dma.done [#allocation3], 256
    $region25: #{tpu_custom_call.1} parent=1 // pred_fallthru
      _
    %951 = vsyncpa [#allocation3], 1

</llo_original>
